<compile_context>
chip_gen: v5e
topology: v5e:2x2
jax: 0.10.0
libtpu: 0.0.40
codegen_flags: <defaults>
</compile_context>

<pallas_src>
import jax
import jax.numpy as jnp
from jax import lax
from jax.experimental import pallas as pl
from jax.experimental.pallas import tpu as pltpu

KH = KW = 3
STRIDE = 2
PAD = 1
BN_EPS = 1e-5

LANE = 128


def _round_up(x, m):
    return (x + m - 1) // m * m


def _vmem_budget_bytes():
    """Per-generation VMEM budget (kept well under physical capacity)."""
    try:
        kind = jax.devices()[0].device_kind.lower()
    except Exception:
        kind = ""
    if "v2" in kind or "v3" in kind:
        return 12 * 1024 * 1024
    if "v5" in kind or "v6" in kind:
        return 96 * 1024 * 1024          # 128 MiB physical VMEM
    return 48 * 1024 * 1024              # v7x: 64 MiB physical; safe default


def _pick_tile(total, cap, unit=LANE, prefer_even_count=False):
    """Largest multiple of `unit` dividing `total` and <= cap.

    With prefer_even_count, prefer tiles giving an even tile count (>=4 if
    possible) so the "parallel" grid axis shards across both v7x TensorCores
    and the pipeline still has steps to overlap.
    """
    cap = max(cap, unit)
    best = unit
    best_even = None
    best_even4 = None
    for mult in range(1, total // unit + 1):
        t = mult * unit
        if t > cap:
            break
        if total % t:
            continue
        best = t
        count = total // t
        if count % 2 == 0:
            best_even = t
            if count >= 4:
                best_even4 = t
    if prefer_even_count:
        if best_even4 is not None:
            return best_even4
        if best_even is not None:
            return best_even
    return best


# -------- pass 1: conv (im2col matmul) + per-tile partial BN statistics -------
def _conv_stats_kernel(p_ref, w_ref, y_ref, psum_ref, psq_ref):
    # MXU matmul: bf16 inputs, f32 accumulation.
    acc = jnp.dot(p_ref[...], w_ref[...], preferred_element_type=jnp.float32)
    y_bf = acc.astype(jnp.bfloat16)      # bf16 intermediate halves HBM traffic
    y_ref[...] = y_bf
    # Partial per-channel stats in f32 from the *stored* (rounded) values so
    # pass 2 normalizes exactly what it reads back.
    y32 = y_bf.astype(jnp.float32)
    psum_ref[...] = jnp.sum(y32, axis=0)[None, None, :]
    psq_ref[...] = jnp.sum(y32 * y32, axis=0)[None, None, :]


# -------- pass 2: folded scale/shift + ReLU + fused transpose to NCHW ---------
def _bn_relu_transpose_kernel(y_ref, scale_ref, shift_ref, o_ref):
    # Pure streaming pass (no MXU work), so the XLU transpose rides in an
    # otherwise idle slot and saves a full output-sized XLA transpose round trip.
    y = y_ref[...].astype(jnp.float32)
    z = jnp.maximum(y * scale_ref[...] + shift_ref[...], 0.0)
    o_ref[...] = z.T                     # (Cout_p, tm2) channel-major block


def down_forward(x_nchw, w_conv, b_conv, gamma, beta):
    """Conv2d(k=3, s=2, p=1) -> BatchNorm2d (batch stats) -> ReLU, NCHW in/out.

    b_conv is accepted for API parity but is mathematically cancelled by the
    training-mode BatchNorm mean subtraction, so it is not applied.
    """
    del b_conv  # cancelled exactly by training-mode BatchNorm (batch statistics)
    N, Cin, H, W = x_nchw.shape
    Cout = w_conv.shape[0]
    Ho = (H + 2 * PAD - KH) // STRIDE + 1
    Wo = (W + 2 * PAD - KW) // STRIDE + 1
    HoWo = Ho * Wo
    M = N * HoWo
    K = KH * KW * Cin

    # ---- lane-dense padding of the matmul dims -------------------------------
    K_p = _round_up(K, LANE)
    Cout_p = _round_up(Cout, 256) if Cout >= 256 else _round_up(Cout, LANE)
    HoWo_p = _round_up(HoWo, LANE)       # per-image padding: tiles never straddle images
    M_p = N * HoWo_p

    # ---- glue: NCHW -> NHWC (early bf16), pad, im2col gather ------------------
    # TODO(synk): do this gather in-kernel with strided DMAs to avoid
    #             materializing the patches matrix in HBM.
    x = jnp.transpose(x_nchw, (0, 2, 3, 1)).astype(jnp.bfloat16)  # early bf16
    x_pad = jnp.pad(x, ((0, 0), (PAD, PAD), (PAD, PAD), (0, 0)))
    cols = []
    for kh in range(KH):
        for kw in range(KW):
            cols.append(
                x_pad[:, kh:kh + STRIDE * Ho:STRIDE, kw:kw + STRIDE * Wo:STRIDE, :])
    patches = jnp.concatenate(cols, axis=-1).reshape(N, HoWo, K)
    patches = jnp.pad(
        patches, ((0, 0), (0, HoWo_p - HoWo), (0, K_p - K)))  # zero rows/cols -> zero stats
    patches = patches.reshape(M_p, K_p)

    # PyTorch conv weight (Cout, Cin, KH, KW) -> (K_p, Cout_p), matching the
    # (kh, kw, cin) patch ordering above.
    w_mat = jnp.transpose(w_conv, (2, 3, 1, 0)).reshape(K, Cout)
    w_mat = jnp.pad(w_mat, ((0, K_p - K), (0, Cout_p - Cout))).astype(jnp.bfloat16)

    # ---- generation-aware tiling ----------------------------------------------
    vmem_budget = _vmem_budget_bytes()
    budget = int(vmem_budget * 0.8)
    # pass 1 per step ~ 2*(tm1*K_p + tm1*Cout_p)*2B (bf16, double-buffered)
    #                 + 2*K_p*Cout_p*2B (weights) + small stats
    w_bytes = 2 * K_p * Cout_p * 2
    tm1_cap = max(LANE, (budget - w_bytes) // (4 * (K_p + Cout_p)))
    tm1 = _pick_tile(M_p, min(tm1_cap, 2048), prefer_even_count=True)
    n_tiles1 = M_p // tm1
    # pass 2 per step ~ 2*(tm2*Cout_p)*2B (bf16 in) + 2*(Cout_p*tm2)*4B (f32 out)
    tm2_cap = max(LANE, budget // (12 * Cout_p))
    tm2 = _pick_tile(HoWo_p, min(tm2_cap, 2048))
    tpi2 = HoWo_p // tm2

    vmem_limit = min(vmem_budget, 100 * 1024 * 1024)
    cparams1 = pltpu.CompilerParams(
        dimension_semantics=("parallel",), vmem_limit_bytes=vmem_limit)
    cparams2 = pltpu.CompilerParams(
        dimension_semantics=("parallel", "parallel"), vmem_limit_bytes=vmem_limit)

    # ---- pass 1: tiled matmul + partial per-channel stats ----------------------
    y, psum, psq = pl.pallas_call(
        _conv_stats_kernel,
        out_shape=(
            jax.ShapeDtypeStruct((M_p, Cout_p), jnp.bfloat16),
            jax.ShapeDtypeStruct((n_tiles1, 1, Cout_p), jnp.float32),
            jax.ShapeDtypeStruct((n_tiles1, 1, Cout_p), jnp.float32),
        ),
        grid=(n_tiles1,),
        in_specs=[
            pl.BlockSpec((tm1, K_p), lambda i: (i, 0)),
            pl.BlockSpec((K_p, Cout_p), lambda i: (0, 0)),   # weights resident
        ],
        out_specs=(
            pl.BlockSpec((tm1, Cout_p), lambda i: (i, 0)),
            pl.BlockSpec((1, 1, Cout_p), lambda i: (i, 0, 0)),
            pl.BlockSpec((1, 1, Cout_p), lambda i: (i, 0, 0)),
        ),
        compiler_params=cparams1,
    )(patches, w_mat)

    # ---- tiny per-channel reduction + folded BN affine (XLA glue) --------------
    total = jnp.sum(psum[:, 0, :], axis=0)
    total_sq = jnp.sum(psq[:, 0, :], axis=0)
    mean = total / M                            # real M, pad rows are zero
    var = jnp.maximum(total_sq / M - mean * mean, 0.0)
    gamma_p = jnp.pad(gamma.astype(jnp.float32), (0, Cout_p - Cout))
    beta_p = jnp.pad(beta.astype(jnp.float32), (0, Cout_p - Cout))
    scale = gamma_p * lax.rsqrt(var + BN_EPS)
    shift = beta_p - mean * scale

    # ---- pass 2: normalize + ReLU + fused transpose to channel-major -----------
    out = pl.pallas_call(
        _bn_relu_transpose_kernel,
        out_shape=jax.ShapeDtypeStruct((N, Cout_p, HoWo_p), jnp.float32),
        grid=(N, tpi2),
        in_specs=[
            pl.BlockSpec((tm2, Cout_p), lambda n, j: (n * tpi2 + j, 0)),
            pl.BlockSpec((1, Cout_p), lambda n, j: (0, 0)),
            pl.BlockSpec((1, Cout_p), lambda n, j: (0, 0)),
        ],
        out_specs=pl.BlockSpec((None, Cout_p, tm2), lambda n, j: (n, 0, j)),
        compiler_params=cparams2,
    )(y, scale.reshape(1, Cout_p), shift.reshape(1, Cout_p))

    # slice padding off; output is already channel-major (NCHW), no transpose
    return out[:, :Cout, :HoWo].reshape(N, Cout, Ho, Wo)


def _reference(x_nchw, w_conv, b_conv, gamma, beta):
    # Mirrors the kernel's deliberate dtype choices (bf16 matmul inputs with f32
    # accumulation, bf16-rounded conv output) so the check isolates kernel
    # correctness from those choices.  The conv bias is cancelled exactly by the
    # training-mode BatchNorm mean subtraction, so it is omitted here too.
    del b_conv
    y = lax.conv_general_dilated(
        x_nchw.astype(jnp.bfloat16), w_conv.astype(jnp.bfloat16),
        window_strides=(STRIDE, STRIDE),
        padding=((PAD, PAD), (PAD, PAD)),
        dimension_numbers=("NCHW", "OIHW", "NCHW"),
        preferred_element_type=jnp.float32)
    y = y.astype(jnp.bfloat16).astype(jnp.float32)
    mean = y.mean(axis=(0, 2, 3), keepdims=True)
    var = ((y - mean) ** 2).mean(axis=(0, 2, 3), keepdims=True)
    y = (y - mean) * lax.rsqrt(var + BN_EPS)
    y = y * gamma.reshape(1, -1, 1, 1) + beta.reshape(1, -1, 1, 1)
    return jnp.maximum(y, 0.0)


if __name__ == "__main__":
    key = jax.random.PRNGKey(0)
    k_x, k_w, k_b = jax.random.split(key, 3)

    N, Cin, H, W = 2, 4, 16, 16
    Cout = 8

    x = jax.random.normal(k_x, (N, Cin, H, W), dtype=jnp.float32)
    # Deterministic synthetic parameters (shapes from the module's __init__):
    w_conv = jax.random.normal(k_w, (Cout, Cin, KH, KW), dtype=jnp.float32) * 0.1
    b_conv = jax.random.normal(k_b, (Cout,), dtype=jnp.float32) * 0.1
    gamma = jnp.ones((Cout,), dtype=jnp.float32)   # BatchNorm2d default init
    beta = jnp.zeros((Cout,), dtype=jnp.float32)

    fwd = jax.jit(down_forward)
    out = jax.block_until_ready(fwd(x, w_conv, b_conv, gamma, beta))

    ref = _reference(x, w_conv, b_conv, gamma, beta)
    assert out.shape == (N, Cout, H // 2, W // 2), out.shape
    max_err = float(jnp.max(jnp.abs(out - ref)))
    assert jnp.allclose(out, ref, atol=2e-3, rtol=2e-3), max_err

    print("KERNEL_OK")
</pallas_src>

<mosaic_0001>
module attributes {stable_mosaic.version = 11 : i64} {
  func.func @_conv_stats_kernel(%arg0: i32, %arg1: memref<128x128xbf16, #tpu.memory_space<vmem>>, %arg2: memref<128x128xbf16, #tpu.memory_space<vmem>>, %arg3: memref<128x128xbf16, #tpu.memory_space<vmem>>, %arg4: memref<1x1x128xf32, #tpu.memory_space<vmem>>, %arg5: memref<1x1x128xf32, #tpu.memory_space<vmem>>) attributes {dimension_semantics = [#tpu.dimension_semantics<parallel>], iteration_bounds = array<i64: 2>, scalar_prefetch = 0 : i64, scratch_operands = 0 : i64, tpu.core_type = #tpu.core_type<tc>, window_params = [{transform_indices = @transform_0, window_bounds = array<i64: 128, 128>}, {pipeline_mode = #tpu.pipeline_mode<synchronous>, transform_indices = @transform_1, window_bounds = array<i64: 128, 128>}, {transform_indices = @transform_2, window_bounds = array<i64: 128, 128>}, {transform_indices = @transform_3, window_bounds = array<i64: 1, 1, 128>}, {transform_indices = @transform_4, window_bounds = array<i64: 1, 1, 128>}]} {
    %c0 = arith.constant 0 : index
    %c0_0 = arith.constant 0 : index
    %0 = vector.load %arg1[%c0, %c0_0] : memref<128x128xbf16, #tpu.memory_space<vmem>>, vector<128x128xbf16>
    %c0_1 = arith.constant 0 : index
    %c0_2 = arith.constant 0 : index
    %1 = vector.load %arg2[%c0_1, %c0_2] : memref<128x128xbf16, #tpu.memory_space<vmem>>, vector<128x128xbf16>
    %cst = arith.constant dense<0.000000e+00> : vector<128x128xf32>
    %2 = tpu.matmul %0, %1, %cst {dimension_numbers = #tpu.dot_dimension_numbers<[1], [0], [0], [1], [0, 0, 1, 1], [], []>} : vector<128x128xbf16>, vector<128x128xbf16>, vector<128x128xf32> -> vector<128x128xf32>
    %3 = arith.truncf %2 : vector<128x128xf32> to vector<128x128xbf16>
    %c0_3 = arith.constant 0 : index
    %c0_4 = arith.constant 0 : index
    %4 = vector.load %arg3[%c0_3, %c0_4] : memref<128x128xbf16, #tpu.memory_space<vmem>>, vector<128x128xbf16>
    tpu.vector_store %arg3[%c0_3, %c0_4], %3 {strides = array<i32>} : memref<128x128xbf16, #tpu.memory_space<vmem>>, vector<128x128xbf16>,
    %5 = arith.extf %3 : vector<128x128xbf16> to vector<128x128xf32>
    %cst_5 = arith.constant dense<0.000000e+00> : vector<128xf32>
    %6 = vector.multi_reduction <add>, %5, %cst_5 [0] : vector<128x128xf32> to vector<128xf32>
    %7 = vector.shape_cast %6 : vector<128xf32> to vector<1x1x128xf32>
    %c0_6 = arith.constant 0 : index
    %c0_7 = arith.constant 0 : index
    %c0_8 = arith.constant 0 : index
    %8 = vector.load %arg4[%c0_6, %c0_7, %c0_8] : memref<1x1x128xf32, #tpu.memory_space<vmem>>, vector<1x1x128xf32>
    tpu.vector_store %arg4[%c0_6, %c0_7, %c0_8], %7 {strides = array<i32>} : memref<1x1x128xf32, #tpu.memory_space<vmem>>, vector<1x1x128xf32>,
    %9 = arith.mulf %5, %5 : vector<128x128xf32>
    %cst_9 = arith.constant dense<0.000000e+00> : vector<128xf32>
    %10 = vector.multi_reduction <add>, %9, %cst_9 [0] : vector<128x128xf32> to vector<128xf32>
    %11 = vector.shape_cast %10 : vector<128xf32> to vector<1x1x128xf32>
    %c0_10 = arith.constant 0 : index
    %c0_11 = arith.constant 0 : index
    %c0_12 = arith.constant 0 : index
    %12 = vector.load %arg5[%c0_10, %c0_11, %c0_12] : memref<1x1x128xf32, #tpu.memory_space<vmem>>, vector<1x1x128xf32>
    tpu.vector_store %arg5[%c0_10, %c0_11, %c0_12], %11 {strides = array<i32>} : memref<1x1x128xf32, #tpu.memory_space<vmem>>, vector<1x1x128xf32>,
    return
  }
  func.func @transform_0(%arg0: i32) -> (i32, i32) {
    %c0_i32 = arith.constant 0 : i32
    %c0_i32_0 = arith.constant 0 : i32
    return %arg0, %c0_i32 : i32, i32
  }
  func.func @transform_1(%arg0: i32) -> (i32, i32) {
    %c0_i32 = arith.constant 0 : i32
    %c0_i32_0 = arith.constant 0 : i32
    %c0_i32_1 = arith.constant 0 : i32
    return %c0_i32, %c0_i32_0 : i32, i32
  }
  func.func @transform_2(%arg0: i32) -> (i32, i32) {
    %c0_i32 = arith.constant 0 : i32
    %c0_i32_0 = arith.constant 0 : i32
    return %arg0, %c0_i32 : i32, i32
  }
  func.func @transform_3(%arg0: i32) -> (i32, i32, i32) {
    %c0_i32 = arith.constant 0 : i32
    %c0_i32_0 = arith.constant 0 : i32
    %c0_i32_1 = arith.constant 0 : i32
    return %arg0, %c0_i32, %c0_i32_0 : i32, i32, i32
  }
  func.func @transform_4(%arg0: i32) -> (i32, i32, i32) {
    %c0_i32 = arith.constant 0 : i32
    %c0_i32_0 = arith.constant 0 : i32
    %c0_i32_1 = arith.constant 0 : i32
    return %arg0, %c0_i32, %c0_i32_0 : i32, i32, i32
  }
}

module attributes {stable_mosaic.version = 11 : i64} {
  func.func @_bn_relu_transpose_kernel(%arg0: i32, %arg1: i32, %arg2: memref<128x128xbf16, #tpu.memory_space<vmem>>, %arg3: memref<1x128xf32, #tpu.memory_space<vmem>>, %arg4: memref<1x128xf32, #tpu.memory_space<vmem>>, %arg5: memref<1x128x128xf32, #tpu.memory_space<vmem>>) attributes {dimension_semantics = [#tpu.dimension_semantics<parallel>, #tpu.dimension_semantics<parallel>], iteration_bounds = array<i64: 2, 1>, scalar_prefetch = 0 : i64, scratch_operands = 0 : i64, tpu.core_type = #tpu.core_type<tc>, window_params = [{transform_indices = @transform_0, window_bounds = array<i64: 128, 128>}, {pipeline_mode = #tpu.pipeline_mode<synchronous>, transform_indices = @transform_1, window_bounds = array<i64: 1, 128>}, {pipeline_mode = #tpu.pipeline_mode<synchronous>, transform_indices = @transform_2, window_bounds = array<i64: 1, 128>}, {transform_indices = @transform_3, window_bounds = array<i64: 1, 128, 128>}]} {
    %c0 = arith.constant 0 : index
    %c0_0 = arith.constant 0 : index
    %0 = vector.load %arg2[%c0, %c0_0] : memref<128x128xbf16, #tpu.memory_space<vmem>>, vector<128x128xbf16>
    %1 = arith.extf %0 : vector<128x128xbf16> to vector<128x128xf32>
    %c0_1 = arith.constant 0 : index
    %c0_2 = arith.constant 0 : index
    %2 = vector.load %arg3[%c0_1, %c0_2] : memref<1x128xf32, #tpu.memory_space<vmem>>, vector<1x128xf32>
    %3 = vector.broadcast %2 : vector<1x128xf32> to vector<128x128xf32>
    %4 = arith.mulf %1, %3 : vector<128x128xf32>
    %c0_3 = arith.constant 0 : index
    %c0_4 = arith.constant 0 : index
    %5 = vector.load %arg4[%c0_3, %c0_4] : memref<1x128xf32, #tpu.memory_space<vmem>>, vector<1x128xf32>
    %6 = vector.broadcast %5 : vector<1x128xf32> to vector<128x128xf32>
    %7 = arith.addf %4, %6 : vector<128x128xf32>
    %cst = arith.constant 0.000000e+00 : f32
    %8 = vector.broadcast %cst : f32 to vector<128x128xf32>
    %9 = arith.maximumf %7, %8 : vector<128x128xf32>
    %10 = tpu.transpose %9, [1, 0] : vector<128x128xf32> -> vector<128x128xf32>
    %c0_5 = arith.constant 0 : index
    %c0_6 = arith.constant 0 : index
    %c0_7 = arith.constant 0 : index
    %11 = vector.load %arg5[%c0_5, %c0_6, %c0_7] : memref<1x128x128xf32, #tpu.memory_space<vmem>>, vector<1x128x128xf32>
    %12 = vector.shape_cast %11 : vector<1x128x128xf32> to vector<128x128xf32>
    %13 = vector.shape_cast %10 : vector<128x128xf32> to vector<1x128x128xf32>
    tpu.vector_store %arg5[%c0_5, %c0_6, %c0_7], %13 {strides = array<i32>} : memref<1x128x128xf32, #tpu.memory_space<vmem>>, vector<1x128x128xf32>,
    return
  }
  func.func @transform_0(%arg0: i32, %arg1: i32) -> (i32, i32) {
    %c1_i32 = arith.constant 1 : i32
    %0 = arith.muli %arg0, %c1_i32 : i32
    %1 = arith.addi %0, %arg1 : i32
    %c0_i32 = arith.constant 0 : i32
    %c0_i32_0 = arith.constant 0 : i32
    return %1, %c0_i32 : i32, i32
  }
  func.func @transform_1(%arg0: i32, %arg1: i32) -> (i32, i32) {
    %c0_i32 = arith.constant 0 : i32
    %c0_i32_0 = arith.constant 0 : i32
    %c0_i32_1 = arith.constant 0 : i32
    return %c0_i32, %c0_i32_0 : i32, i32
  }
  func.func @transform_2(%arg0: i32, %arg1: i32) -> (i32, i32) {
    %c0_i32 = arith.constant 0 : i32
    %c0_i32_0 = arith.constant 0 : i32
    %c0_i32_1 = arith.constant 0 : i32
    return %c0_i32, %c0_i32_0 : i32, i32
  }
  func.func @transform_3(%arg0: i32, %arg1: i32) -> (i32, i32, i32) {
    %c0_i32 = arith.constant 0 : i32
    %c0_i32_0 = arith.constant 0 : i32
    return %arg0, %c0_i32, %arg1 : i32, i32, i32
  }
}

</mosaic_0001>

<llo_original>
// kernel: down_forward.3
$region0: #{down_forward.3}
  #allocation0 [shape = 'u32[]', space=smem, size = 0x4, offset = 0x4, fixed_abs, tag = 'smem constant byte address 0x4 - core index']
  #allocation1 [shape = 'u32[72,128]{1,0:T(1,128)}', space=vmem, size = 0x9000, scoped, tag = 'internal scratch']
  %s0 = inlined_call_operand.vmem [shape: bf16[256,128], index: 0, kind: input, shape index: {}]
  %s1 = inlined_call_operand.vmem [shape: f32[1,128], index: 1, kind: input, shape index: {}]
  %s2 = inlined_call_operand.vmem [shape: f32[1,128], index: 2, kind: input, shape index: {}]
  %s3 = inlined_call_operand.vmem [shape: f32[2,128,128], index: 3, kind: output, shape index: {}]
  %s4 = sld [smem:[#allocation0]]
  $region45: #{down_forward.3} parent=0
    _
  %s6 = ssub.s32 1, %s4
  %s7 = scalar_select 0, %s6, %s4
  loop: start=0, step=1, limit=4
  $region2: #{down_forward.3} parent=0 // loop_pre_header
    _
  $region3: #{down_forward.3} parent=0 // loop_header
    %s9 = sphi 0, %s13
    %p10 = scmp.ge.s32.totalorder %s9, 4
    %s16 = sphi 0, %s28
    %s17 = sphi 0, %s24
    %s18 = sphi 0, %s16
    %s19 = sphi 0, %s17
    %s20 = sphi 0, %s18
    %s21 = sphi 0, %s19
    %s33 = sphi 0, %s35
    %s36 = sphi 0, %s33
    %s37 = sphi 0, %s36
    %s53 = sphi 0, %s37
    %s57 = sphi 0, %s57
    %s59 = sphi 0, %s57
    %s60 = sphi 0, %s59
    %s74 = sphi 0, %s60
    %s78 = sphi 0, %s78
    %s80 = sphi 0, %s78
    %s81 = sphi 0, %s80
    %s95 = sphi 0, %s81
    %s103 = sphi 0, %s105
    %s106 = sphi 0, %s103
    %s107 = sphi 0, %s106
    %s123 = sphi 0, %s107
  $region4: #{down_forward.3} parent=0 // loop_header_branch
    %12 = sbr.rel (%p10) target = $region8
  $region5: #{down_forward.3} parent=0 // loop_body
    %s14 = ssub.s32 %s9, 1
    %s15 = ssub.s32 %s9, 2
    %s22 = sadd.s32 1, %s17
    %p23 = scmp.ge.s32.totalorder %s22, 1
    %s24 = scalar_select %p23, 0, %s22
    %s25 = sadd.s32 1, %s16
    %s26 = scalar_select %p23, %s25, %s16
    %p27 = scmp.ge.s32.totalorder %s26, 2
    %s28 = scalar_select %p27, 0, %s26
    %s29 = sadd.s32 %s16, %s17
    %s30 = sadd.s32 %s28, %s24
    %s31 = ssub.s32 %s29, %s30
    %p32 = scmp.eq.s32.totalorder %s31, 0
    %s34 = sadd.s32 %s33, 1
    %s35 = scalar_select %p32, %s33, %s34
    %p38 = pneg %p32
    %p39 = scmp.eq.s32.totalorder %s9, 1
    %p40 = por %p38, %p39
    %p41 = scmp.ne.s32.totalorder %s33, %s36
    %p42 = scmp.eq.s32.totalorder %s9, 0
    %p43 = por %p41, %p42
    %p44 = scmp.ne.s32.totalorder %s33, %s36
    %p45 = scmp.eq.s32.totalorder %s14, 1
    %p46 = por %p44, %p45
    %p47 = scmp.ne.s32.totalorder %s36, %s37
    %p48 = scmp.eq.s32.totalorder %s14, 0
    %p49 = por %p47, %p48
    %p50 = scmp.ne.s32.totalorder %s36, %s37
    %p51 = scmp.eq.s32.totalorder %s15, 1
    %p52 = por %p50, %p51
    %p54 = scmp.ne.s32.totalorder %s37, %s53
    %p55 = scmp.eq.s32.totalorder %s15, 0
    %p56 = por %p54, %p55
    %s58 = sadd.s32 %s57, 1
    %p61 = scmp.eq.s32.totalorder %s9, 1
    %p62 = scmp.ne.s32.totalorder %s57, %s59
    %p63 = scmp.eq.s32.totalorder %s9, 0
    %p64 = por %p62, %p63
    %p65 = scmp.ne.s32.totalorder %s57, %s59
    %p66 = scmp.eq.s32.totalorder %s14, 1
    %p67 = por %p65, %p66
    %p68 = scmp.ne.s32.totalorder %s59, %s60
    %p69 = scmp.eq.s32.totalorder %s14, 0
    %p70 = por %p68, %p69
    %p71 = scmp.ne.s32.totalorder %s59, %s60
    %p72 = scmp.eq.s32.totalorder %s15, 1
    %p73 = por %p71, %p72
    %p75 = scmp.ne.s32.totalorder %s60, %s74
    %p76 = scmp.eq.s32.totalorder %s15, 0
    %p77 = por %p75, %p76
    %s79 = sadd.s32 %s78, 1
    %p82 = scmp.eq.s32.totalorder %s9, 1
    %p83 = scmp.ne.s32.totalorder %s78, %s80
    %p84 = scmp.eq.s32.totalorder %s9, 0
    %p85 = por %p83, %p84
    %p86 = scmp.ne.s32.totalorder %s78, %s80
    %p87 = scmp.eq.s32.totalorder %s14, 1
    %p88 = por %p86, %p87
    %p89 = scmp.ne.s32.totalorder %s80, %s81
    %p90 = scmp.eq.s32.totalorder %s14, 0
    %p91 = por %p89, %p90
    %p92 = scmp.ne.s32.totalorder %s80, %s81
    %p93 = scmp.eq.s32.totalorder %s15, 1
    %p94 = por %p92, %p93
    %p96 = scmp.ne.s32.totalorder %s81, %s95
    %p97 = scmp.eq.s32.totalorder %s15, 0
    %p98 = por %p96, %p97
    %s99 = ssub.s32 %s16, %s28
    %s100 = ssub.s32 %s17, %s24
    %s101 = sor.u32 %s99, %s100
    %p102 = scmp.eq.s32.totalorder %s101, 0
    %s104 = sadd.s32 %s103, 1
    %s105 = scalar_select %p102, %s103, %s104
    %p108 = pneg %p102
    %p109 = scmp.eq.s32.totalorder %s9, 1
    %p110 = por %p108, %p109
    %p111 = scmp.ne.s32.totalorder %s103, %s106
    %p112 = scmp.eq.s32.totalorder %s9, 0
    %p113 = por %p111, %p112
    %p114 = scmp.ne.s32.totalorder %s103, %s106
    %p115 = scmp.eq.s32.totalorder %s14, 1
    %p116 = por %p114, %p115
    %p117 = scmp.ne.s32.totalorder %s106, %s107
    %p118 = scmp.eq.s32.totalorder %s14, 0
    %p119 = por %p117, %p118
    %p120 = scmp.ne.s32.totalorder %s106, %s107
    %p121 = scmp.eq.s32.totalorder %s15, 1
    %p122 = por %p120, %p121
    %p124 = scmp.ne.s32.totalorder %s107, %s123
    %p125 = scmp.eq.s32.totalorder %s15, 0
    %p126 = por %p124, %p125
    %p127 = scmp.le.s32.totalorder 1, %s9
    %p128 = scmp.lt.s32.totalorder %s9, 3
    %p129 = pnand %p127, %p128
    %p130 = pneg %p129
    // Predicated region
    $region9: #{down_forward.3} parent=5 // pred_check
      _
    $region10: #{down_forward.3} parent=5 // pred_check_branch
      %132 = sbr.rel (%p129) target = $region12
    $region11: #{down_forward.3} parent=5 // pred_region
      %s133 = ssub.s32 %s9, 1
      // Predicated region
      $region13: #{down_forward.3} parent=11 // pred_check
        %p134 = pneg %p70
      $region14: #{down_forward.3} parent=11 // pred_check_branch
        %136 = sbr.rel (%p134) target = $region16
      $region15: #{down_forward.3} parent=11 // pred_region
        _
      $region16: #{down_forward.3} parent=11 // pred_fallthru
        _
      // Predicated region
      $region17: #{down_forward.3} parent=11 // pred_check
        %p137 = pneg %p91
      $region18: #{down_forward.3} parent=11 // pred_check_branch
        %139 = sbr.rel (%p137) target = $region20
      $region19: #{down_forward.3} parent=11 // pred_region
        _
      $region20: #{down_forward.3} parent=11 // pred_fallthru
        _
    $region12: #{down_forward.3} parent=5 // pred_fallthru
      _
    %p140 = scmp.lt.s32.totalorder %s9, 2
    // Predicated region
    $region21: #{down_forward.3} parent=5 // pred_check
      %p141 = pneg %p140
    $region22: #{down_forward.3} parent=5 // pred_check_branch
      %143 = sbr.rel (%p141) target = $region24
    $region23: #{down_forward.3} parent=5 // pred_region
      // Predicated region
      $region25: #{down_forward.3} parent=23 // pred_check
        %p144 = pneg %p43
      $region26: #{down_forward.3} parent=23 // pred_check_branch
        %146 = sbr.rel (%p144) target = $region28
      $region27: #{down_forward.3} parent=23 // pred_region
        %s147 = sadd.s32 %s16, %s17
        %s148 = smul.u32 16, %s147
        %p149 = scmp.lt.s32.totalorder %s148, 31
        %s150 = scalar_select %p149, %s148, 31
        %s151 = smul.addr %s150, 4
        %s152 = scalar_lea.vmem %s0, %s151
        %s153 = sadd.s32 %s16, %s17
        %s154 = smul.u32 16, %s153
      $region28: #{down_forward.3} parent=23 // pred_fallthru
        _
    $region24: #{down_forward.3} parent=5 // pred_fallthru
      _
    %p155 = scmp.le.s32.totalorder 1, %s9
    %p156 = scmp.lt.s32.totalorder %s9, 3
    %p157 = pnand %p155, %p156
    %p158 = pneg %p157
    // Predicated region
    $region29: #{down_forward.3} parent=5 // pred_check
      _
    $region30: #{down_forward.3} parent=5 // pred_check_branch
      %160 = sbr.rel (%p157) target = $region32
    $region31: #{down_forward.3} parent=5 // pred_region
      %s161 = ssub.s32 %s9, 1
      %s162 = sadd.s32 %s18, %s19
      %s163 = smul.u32 16, %s162
      %p164 = scmp.lt.s32.totalorder %s163, 31
      %s165 = scalar_select %p164, %s163, 31
      %s166 = smul.addr %s165, 4
      %s167 = scalar_lea.vmem %s0, %s166
      %p168 = pneg %p49
      %p169 = pneg %p46
      %p170 = pneg %p70
      %p171 = pneg %p67
      %p172 = pneg %p91
      %p173 = pneg %p88
      %p174 = pneg %p119
      %p175 = pneg %p116
      %p176 = scmp.lt.s32.totalorder %s18, 1
      %s177 = scalar_select %p176, %s18, 1
      %p178 = scmp.lt.s32.totalorder %s19, 0
      %s179 = scalar_select %p178, %s19, 0
      %s180 = smul.addr %s177, 16
      %s181 = sadd.s32 %s179, %s180
      %s182 = smul.addr %s181, 8
      %s183 = scalar_lea.vmem %s3, %s182
      %s184 = sadd.s32 %s18, %s19
      %s185 = smul.u32 16, %s184
      %p186 = scmp.lt.s32.totalorder %s185, 31
      %s187 = scalar_select %p186, %s185, 31
      %s188 = smul.addr %s187, 4
      %s189 = scalar_lea.vmem %s0, %s188
      %s190 = sadd.s32 %s18, %s19
      %s191 = smul.u32 16, %s190
      %p192 = scmp.lt.s32.totalorder %s18, 1
      %s193 = scalar_select %p192, %s18, 1
      %p194 = scmp.lt.s32.totalorder %s19, 0
      %s195 = scalar_select %p194, %s19, 0
      %s196 = smul.addr %s193, 16
      %s197 = sadd.s32 %s195, %s196
      %s198 = smul.addr %s197, 8
      %s199 = scalar_lea.vmem %s3, %s198
      %v200 = vld [vmem:[%s189] sm:$0xf]
      %v201 = vld [vmem:[%s189 + $0x4] sm:$0xf]
      %v202 = vld [vmem:[%s189 + $0x8] sm:$0xf]
      %v203 = vld [vmem:[%s189 + $0xc] sm:$0xf]
      %v204 = vld [vmem:[%s189 + $0x10] sm:$0xf]
      %v205 = vld [vmem:[%s189 + $0x14] sm:$0xf]
      %v206 = vld [vmem:[%s189 + $0x18] sm:$0xf]
      %v207 = vld [vmem:[%s189 + $0x1c] sm:$0xf]
      %v208 = vld [vmem:[%s189 + $0x20] sm:$0xf]
      %v209 = vld [vmem:[%s189 + $0x24] sm:$0xf]
      %v210 = vld [vmem:[%s189 + $0x28] sm:$0xf]
      %v211 = vld [vmem:[%s189 + $0x2c] sm:$0xf]
      %v212 = vld [vmem:[%s189 + $0x30] sm:$0xf]
      %v213 = vld [vmem:[%s189 + $0x34] sm:$0xf]
      %v214 = vld [vmem:[%s189 + $0x38] sm:$0xf]
      %v215 = vld [vmem:[%s189 + $0x3c] sm:$0xf]
      %v216 = vunpack.c.l.bf16 %v200
      %v217 = vunpack.c.l.bf16 %v201
      %v218 = vunpack.c.l.bf16 %v202
      %v219 = vunpack.c.l.bf16 %v203
      %v220 = vunpack.c.l.bf16 %v204
      %v221 = vunpack.c.l.bf16 %v205
      %v222 = vunpack.c.l.bf16 %v206
      %v223 = vunpack.c.l.bf16 %v207
      %v224 = vunpack.c.l.bf16 %v208
      %v225 = vunpack.c.l.bf16 %v209
      %v226 = vunpack.c.l.bf16 %v210
      %v227 = vunpack.c.l.bf16 %v211
      %v228 = vunpack.c.l.bf16 %v212
      %v229 = vunpack.c.l.bf16 %v213
      %v230 = vunpack.c.l.bf16 %v214
      %v231 = vunpack.c.l.bf16 %v215
      %v232 = vld [vmem:[%s1] sm:$0x1]
      %v234 = vperm.slane %v232, 0
      %v236 = vmul.f32 %v216, %v234
      %v237 = vmul.f32 %v217, %v234
      %v238 = vmul.f32 %v218, %v234
      %v239 = vmul.f32 %v219, %v234
      %v240 = vmul.f32 %v220, %v234
      %v241 = vmul.f32 %v221, %v234
      %v242 = vmul.f32 %v222, %v234
      %v243 = vmul.f32 %v223, %v234
      %v244 = vmul.f32 %v224, %v234
      %v245 = vmul.f32 %v225, %v234
      %v246 = vmul.f32 %v226, %v234
      %v247 = vmul.f32 %v227, %v234
      %v248 = vmul.f32 %v228, %v234
      %v249 = vmul.f32 %v229, %v234
      %v250 = vmul.f32 %v230, %v234
      %v251 = vmul.f32 %v231, %v234
      %v252 = vld [vmem:[%s2] sm:$0x1]
      %v254 = vperm.slane %v252, 0
      %v256 = vadd.f32 %v236, %v254
      %v257 = vadd.f32 %v237, %v254
      %v258 = vadd.f32 %v238, %v254
      %v259 = vadd.f32 %v239, %v254
      %v260 = vadd.f32 %v240, %v254
      %v261 = vadd.f32 %v241, %v254
      %v262 = vadd.f32 %v242, %v254
      %v263 = vadd.f32 %v243, %v254
      %v264 = vadd.f32 %v244, %v254
      %v265 = vadd.f32 %v245, %v254
      %v266 = vadd.f32 %v246, %v254
      %v267 = vadd.f32 %v247, %v254
      %v268 = vadd.f32 %v248, %v254
      %v269 = vadd.f32 %v249, %v254
      %v270 = vadd.f32 %v250, %v254
      %v271 = vadd.f32 %v251, %v254
      %v272 = vmax.f32 %v256, 0.0
      %v273 = vmax.f32 %v257, 0.0
      %v274 = vmax.f32 %v258, 0.0
      %v275 = vmax.f32 %v259, 0.0
      %v276 = vmax.f32 %v260, 0.0
      %v277 = vmax.f32 %v261, 0.0
      %v278 = vmax.f32 %v262, 0.0
      %v279 = vmax.f32 %v263, 0.0
      %v280 = vmax.f32 %v264, 0.0
      %v281 = vmax.f32 %v265, 0.0
      %v282 = vmax.f32 %v266, 0.0
      %v283 = vmax.f32 %v267, 0.0
      %v284 = vmax.f32 %v268, 0.0
      %v285 = vmax.f32 %v269, 0.0
      %v286 = vmax.f32 %v270, 0.0
      %v287 = vmax.f32 %v271, 0.0
      %288 = vxpose.xlu0.b32.start [1/16] %v272, 128
      %289 = vxpose.xlu0.b32.cont [2/16] %v273, 128
      %290 = vxpose.xlu0.b32.cont [3/16] %v274, 128
      %291 = vxpose.xlu0.b32.cont [4/16] %v275, 128
      %292 = vxpose.xlu0.b32.cont [5/16] %v276, 128
      %293 = vxpose.xlu0.b32.cont [6/16] %v277, 128
      %294 = vxpose.xlu0.b32.cont [7/16] %v278, 128
      %295 = vxpose.xlu0.b32.cont [8/16] %v279, 128
      %296 = vxpose.xlu0.b32.cont [9/16] %v280, 128
      %297 = vxpose.xlu0.b32.cont [10/16] %v281, 128
      %298 = vxpose.xlu0.b32.cont [11/16] %v282, 128
      %299 = vxpose.xlu0.b32.cont [12/16] %v283, 128
      %300 = vxpose.xlu0.b32.cont [13/16] %v284, 128
      %301 = vxpose.xlu0.b32.cont [14/16] %v285, 128
      %302 = vxpose.xlu0.b32.cont [15/16] %v286, 128
      %303 = vxpose.xlu0.b32.end [16/16] %v287, 128
      %v304 = vpop.trf.xlu0
      %v305 = vpop.trf.xlu0
      %v306 = vpop.trf.xlu0
      %v307 = vpop.trf.xlu0
      %v308 = vpop.trf.xlu0
      %v309 = vpop.trf.xlu0
      %v310 = vpop.trf.xlu0
      %v311 = vpop.trf.xlu0
      %v312 = vpop.trf.xlu0
      %v313 = vpop.trf.xlu0
      %v314 = vpop.trf.xlu0
      %v315 = vpop.trf.xlu0
      %v316 = vpop.trf.xlu0
      %v317 = vpop.trf.xlu0
      %v318 = vpop.trf.xlu0
      %v319 = vpop.trf.xlu0
      %320 = vst [vmem:[%s199] sm:$0xff] %v304
      %321 = vst [vmem:[%s199 + $0x8] sm:$0xff] %v305
      %322 = vst [vmem:[%s199 + $0x10] sm:$0xff] %v306
      %323 = vst [vmem:[%s199 + $0x18] sm:$0xff] %v307
      %324 = vst [vmem:[%s199 + $0x20] sm:$0xff] %v308
      %325 = vst [vmem:[%s199 + $0x28] sm:$0xff] %v309
      %326 = vst [vmem:[%s199 + $0x30] sm:$0xff] %v310
      %327 = vst [vmem:[%s199 + $0x38] sm:$0xff] %v311
      %328 = vst [vmem:[%s199 + $0x40] sm:$0xff] %v312
      %329 = vst [vmem:[%s199 + $0x48] sm:$0xff] %v313
      %330 = vst [vmem:[%s199 + $0x50] sm:$0xff] %v314
      %331 = vst [vmem:[%s199 + $0x58] sm:$0xff] %v315
      %332 = vst [vmem:[%s199 + $0x60] sm:$0xff] %v316
      %333 = vst [vmem:[%s199 + $0x68] sm:$0xff] %v317
      %334 = vst [vmem:[%s199 + $0x70] sm:$0xff] %v318
      %335 = vst [vmem:[%s199 + $0x78] sm:$0xff] %v319
      %p336 = scmp.lt.s32.totalorder %s18, 1
      %s337 = scalar_select %p336, %s18, 1
      %p338 = scmp.lt.s32.totalorder %s19, 0
      %s339 = scalar_select %p338, %s19, 0
      %s340 = smul.addr %s337, 16
      %s341 = sadd.s32 %s339, %s340
      %s342 = smul.addr %s341, 8
      %s343 = scalar_lea.vmem %s3, %s342
      // Predicated region
      $region33: #{down_forward.3} parent=31 // pred_check
        %p344 = pneg %p116
      $region34: #{down_forward.3} parent=31 // pred_check_branch
        %346 = sbr.rel (%p344) target = $region36
      $region35: #{down_forward.3} parent=31 // pred_region
        _
      $region36: #{down_forward.3} parent=31 // pred_fallthru
        _
    $region32: #{down_forward.3} parent=5 // pred_fallthru
      _
    %p347 = scmp.le.s32.totalorder 2, %s9
    // Predicated region
    $region37: #{down_forward.3} parent=5 // pred_check
      %p348 = pneg %p347
    $region38: #{down_forward.3} parent=5 // pred_check_branch
      %350 = sbr.rel (%p348) target = $region40
    $region39: #{down_forward.3} parent=5 // pred_region
      %s351 = ssub.s32 %s9, 2
      // Predicated region
      $region41: #{down_forward.3} parent=39 // pred_check
        %p352 = pneg %p122
      $region42: #{down_forward.3} parent=39 // pred_check_branch
        %354 = sbr.rel (%p352) target = $region44
      $region43: #{down_forward.3} parent=39 // pred_region
        %p355 = scmp.lt.s32.totalorder %s20, 1
        %s356 = scalar_select %p355, %s20, 1
        %p357 = scmp.lt.s32.totalorder %s21, 0
        %s358 = scalar_select %p357, %s21, 0
        %s359 = smul.addr %s356, 16
        %s360 = sadd.s32 %s358, %s359
        %s361 = smul.addr %s360, 8
        %s362 = scalar_lea.vmem %s3, %s361
      $region44: #{down_forward.3} parent=39 // pred_fallthru
        _
    $region40: #{down_forward.3} parent=5 // pred_fallthru
      _
  $region6: #{down_forward.3} parent=0 // loop_footer
    %s13 = sadd.s32 1, %s9
  $region7: #{down_forward.3} parent=0 // loop_footer_branch
    %8 = sbr.rel target = $region3
  $region8: #{down_forward.3} parent=0 // loop_exit
    _

// kernel: down_forward.2
$region0: #{down_forward.2}
  #allocation0 [shape = 'u32[]', space=smem, size = 0x4, offset = 0x4, fixed_abs, tag = 'smem constant byte address 0x4 - core index']
  #allocation1 [shape = 'u32[72,128]{1,0:T(1,128)}', space=vmem, size = 0x9000, scoped, tag = 'internal scratch']
  %s0 = inlined_call_operand.vmem [shape: bf16[256,128], index: 0, kind: input, shape index: {}]
  %s1 = inlined_call_operand.vmem [shape: bf16[128,128], index: 1, kind: input, shape index: {}]
  %s2 = inlined_call_operand.vmem [shape: bf16[256,128], index: 2, kind: output, shape index: {0}]
  %s3 = inlined_call_operand.vmem [shape: f32[2,1,128], index: 3, kind: output, shape index: {1}]
  %s4 = inlined_call_operand.vmem [shape: f32[2,1,128], index: 4, kind: output, shape index: {2}]
  %5 = xla_tuple %s2, %s3, %s4
  %s6 = sld [smem:[#allocation0]]
  $region57: #{down_forward.2} parent=0
    _
  %s8 = ssub.s32 1, %s6
  %s9 = scalar_select 0, %s8, %s6
  loop: start=0, step=1, limit=4
  $region2: #{down_forward.2} parent=0 // loop_pre_header
    _
  $region3: #{down_forward.2} parent=0 // loop_header
    %s11 = sphi 0, %s15
    %p12 = scmp.ge.s32.totalorder %s11, 4
    %s21 = sphi 0, %s23
    %s24 = sphi 0, %s21
    %s25 = sphi 0, %s24
    %s41 = sphi 0, %s25
    %s45 = sphi 0, %s45
    %s47 = sphi 0, %s45
    %s48 = sphi 0, %s47
    %s62 = sphi 0, %s48
    %s68 = sphi 0, %s70
    %s71 = sphi 0, %s68
    %s72 = sphi 0, %s71
    %s88 = sphi 0, %s72
    %s94 = sphi 0, %s96
    %s97 = sphi 0, %s94
    %s98 = sphi 0, %s97
    %s114 = sphi 0, %s98
    %s120 = sphi 0, %s122
    %s123 = sphi 0, %s120
    %s124 = sphi 0, %s123
    %s140 = sphi 0, %s124
  $region4: #{down_forward.2} parent=0 // loop_header_branch
    %14 = sbr.rel (%p12) target = $region8
  $region5: #{down_forward.2} parent=0 // loop_body
    %s16 = ssub.s32 %s11, 1
    %s17 = ssub.s32 %s11, 2
    %s18 = sadd.s32 %s11, 1
    %s19 = ssub.s32 %s11, %s18
    %p20 = scmp.eq.s32.totalorder %s19, 0
    %s22 = sadd.s32 %s21, 1
    %s23 = scalar_select %p20, %s21, %s22
    %p26 = pneg %p20
    %p27 = scmp.eq.s32.totalorder %s11, 1
    %p28 = por %p26, %p27
    %p29 = scmp.ne.s32.totalorder %s21, %s24
    %p30 = scmp.eq.s32.totalorder %s11, 0
    %p31 = por %p29, %p30
    %p32 = scmp.ne.s32.totalorder %s21, %s24
    %p33 = scmp.eq.s32.totalorder %s16, 1
    %p34 = por %p32, %p33
    %p35 = scmp.ne.s32.totalorder %s24, %s25
    %p36 = scmp.eq.s32.totalorder %s16, 0
    %p37 = por %p35, %p36
    %p38 = scmp.ne.s32.totalorder %s24, %s25
    %p39 = scmp.eq.s32.totalorder %s17, 1
    %p40 = por %p38, %p39
    %p42 = scmp.ne.s32.totalorder %s25, %s41
    %p43 = scmp.eq.s32.totalorder %s17, 0
    %p44 = por %p42, %p43
    %s46 = sadd.s32 %s45, 1
    %p49 = scmp.eq.s32.totalorder %s11, 1
    %p50 = scmp.ne.s32.totalorder %s45, %s47
    %p51 = scmp.eq.s32.totalorder %s11, 0
    %p52 = por %p50, %p51
    %p53 = scmp.ne.s32.totalorder %s45, %s47
    %p54 = scmp.eq.s32.totalorder %s16, 1
    %p55 = por %p53, %p54
    %p56 = scmp.ne.s32.totalorder %s47, %s48
    %p57 = scmp.eq.s32.totalorder %s16, 0
    %p58 = por %p56, %p57
    %p59 = scmp.ne.s32.totalorder %s47, %s48
    %p60 = scmp.eq.s32.totalorder %s17, 1
    %p61 = por %p59, %p60
    %p63 = scmp.ne.s32.totalorder %s48, %s62
    %p64 = scmp.eq.s32.totalorder %s17, 0
    %p65 = por %p63, %p64
    %s66 = ssub.s32 %s11, %s18
    %p67 = scmp.eq.s32.totalorder %s66, 0
    %s69 = sadd.s32 %s68, 1
    %s70 = scalar_select %p67, %s68, %s69
    %p73 = pneg %p67
    %p74 = scmp.eq.s32.totalorder %s11, 1
    %p75 = por %p73, %p74
    %p76 = scmp.ne.s32.totalorder %s68, %s71
    %p77 = scmp.eq.s32.totalorder %s11, 0
    %p78 = por %p76, %p77
    %p79 = scmp.ne.s32.totalorder %s68, %s71
    %p80 = scmp.eq.s32.totalorder %s16, 1
    %p81 = por %p79, %p80
    %p82 = scmp.ne.s32.totalorder %s71, %s72
    %p83 = scmp.eq.s32.totalorder %s16, 0
    %p84 = por %p82, %p83
    %p85 = scmp.ne.s32.totalorder %s71, %s72
    %p86 = scmp.eq.s32.totalorder %s17, 1
    %p87 = por %p85, %p86
    %p89 = scmp.ne.s32.totalorder %s72, %s88
    %p90 = scmp.eq.s32.totalorder %s17, 0
    %p91 = por %p89, %p90
    %s92 = ssub.s32 %s11, %s18
    %p93 = scmp.eq.s32.totalorder %s92, 0
    %s95 = sadd.s32 %s94, 1
    %s96 = scalar_select %p93, %s94, %s95
    %p99 = pneg %p93
    %p100 = scmp.eq.s32.totalorder %s11, 1
    %p101 = por %p99, %p100
    %p102 = scmp.ne.s32.totalorder %s94, %s97
    %p103 = scmp.eq.s32.totalorder %s11, 0
    %p104 = por %p102, %p103
    %p105 = scmp.ne.s32.totalorder %s94, %s97
    %p106 = scmp.eq.s32.totalorder %s16, 1
    %p107 = por %p105, %p106
    %p108 = scmp.ne.s32.totalorder %s97, %s98
    %p109 = scmp.eq.s32.totalorder %s16, 0
    %p110 = por %p108, %p109
    %p111 = scmp.ne.s32.totalorder %s97, %s98
    %p112 = scmp.eq.s32.totalorder %s17, 1
    %p113 = por %p111, %p112
    %p115 = scmp.ne.s32.totalorder %s98, %s114
    %p116 = scmp.eq.s32.totalorder %s17, 0
    %p117 = por %p115, %p116
    %s118 = ssub.s32 %s11, %s18
    %p119 = scmp.eq.s32.totalorder %s118, 0
    %s121 = sadd.s32 %s120, 1
    %s122 = scalar_select %p119, %s120, %s121
    %p125 = pneg %p119
    %p126 = scmp.eq.s32.totalorder %s11, 1
    %p127 = por %p125, %p126
    %p128 = scmp.ne.s32.totalorder %s120, %s123
    %p129 = scmp.eq.s32.totalorder %s11, 0
    %p130 = por %p128, %p129
    %p131 = scmp.ne.s32.totalorder %s120, %s123
    %p132 = scmp.eq.s32.totalorder %s16, 1
    %p133 = por %p131, %p132
    %p134 = scmp.ne.s32.totalorder %s123, %s124
    %p135 = scmp.eq.s32.totalorder %s16, 0
    %p136 = por %p134, %p135
    %p137 = scmp.ne.s32.totalorder %s123, %s124
    %p138 = scmp.eq.s32.totalorder %s17, 1
    %p139 = por %p137, %p138
    %p141 = scmp.ne.s32.totalorder %s124, %s140
    %p142 = scmp.eq.s32.totalorder %s17, 0
    %p143 = por %p141, %p142
    %p144 = scmp.le.s32.totalorder 1, %s11
    %p145 = scmp.lt.s32.totalorder %s11, 3
    %p146 = pnand %p144, %p145
    %p147 = pneg %p146
    // Predicated region
    $region9: #{down_forward.2} parent=5 // pred_check
      _
    $region10: #{down_forward.2} parent=5 // pred_check_branch
      %149 = sbr.rel (%p146) target = $region12
    $region11: #{down_forward.2} parent=5 // pred_region
      %s150 = ssub.s32 %s11, 1
      // Predicated region
      $region13: #{down_forward.2} parent=11 // pred_check
        %p151 = pneg %p58
      $region14: #{down_forward.2} parent=11 // pred_check_branch
        %153 = sbr.rel (%p151) target = $region16
      $region15: #{down_forward.2} parent=11 // pred_region
        _
      $region16: #{down_forward.2} parent=11 // pred_fallthru
        _
    $region12: #{down_forward.2} parent=5 // pred_fallthru
      _
    %p154 = scmp.lt.s32.totalorder %s11, 2
    // Predicated region
    $region17: #{down_forward.2} parent=5 // pred_check
      %p155 = pneg %p154
    $region18: #{down_forward.2} parent=5 // pred_check_branch
      %157 = sbr.rel (%p155) target = $region20
    $region19: #{down_forward.2} parent=5 // pred_region
      // Predicated region
      $region21: #{down_forward.2} parent=19 // pred_check
        %p158 = pneg %p31
      $region22: #{down_forward.2} parent=19 // pred_check_branch
        %160 = sbr.rel (%p158) target = $region24
      $region23: #{down_forward.2} parent=19 // pred_region
        %s161 = smul.u32 16, %s11
        %p162 = scmp.lt.s32.totalorder %s161, 31
        %s163 = scalar_select %p162, %s161, 31
        %s164 = smul.addr %s163, 4
        %s165 = scalar_lea.vmem %s0, %s164
        %s166 = smul.u32 16, %s11
      $region24: #{down_forward.2} parent=19 // pred_fallthru
        _
    $region20: #{down_forward.2} parent=5 // pred_fallthru
      _
    %p167 = scmp.le.s32.totalorder 1, %s11
    %p168 = scmp.lt.s32.totalorder %s11, 3
    %p169 = pnand %p167, %p168
    %p170 = pneg %p169
    // Predicated region
    $region25: #{down_forward.2} parent=5 // pred_check
      _
    $region26: #{down_forward.2} parent=5 // pred_check_branch
      %172 = sbr.rel (%p169) target = $region28
    $region27: #{down_forward.2} parent=5 // pred_region
      %s173 = ssub.s32 %s11, 1
      %s174 = smul.u32 16, %s16
      %p175 = scmp.lt.s32.totalorder %s174, 31
      %s176 = scalar_select %p175, %s174, 31
      %s177 = smul.addr %s176, 4
      %s178 = scalar_lea.vmem %s0, %s177
      %p179 = pneg %p37
      %p180 = pneg %p34
      %p181 = pneg %p58
      %p182 = pneg %p55
      %p183 = pneg %p84
      %p184 = pneg %p81
      %s185 = smul.u32 16, %s16
      %p186 = scmp.lt.s32.totalorder %s185, 31
      %s187 = scalar_select %p186, %s185, 31
      %s188 = smul.addr %s187, 4
      %s189 = scalar_lea.vmem %s2, %s188
      %p190 = pneg %p110
      %p191 = pneg %p107
      %p192 = scmp.lt.s32.totalorder %s16, 1
      %s193 = scalar_select %p192, %s16, 1
      %s194 = scalar_lea.vmem %s3, %s193
      %p195 = pneg %p136
      %p196 = pneg %p133
      %p197 = scmp.lt.s32.totalorder %s16, 1
      %s198 = scalar_select %p197, %s16, 1
      %s199 = scalar_lea.vmem %s4, %s198
      %s200 = smul.u32 16, %s16
      %p201 = scmp.lt.s32.totalorder %s200, 31
      %s202 = scalar_select %p201, %s200, 31
      %s203 = smul.addr %s202, 4
      %s204 = scalar_lea.vmem %s0, %s203
      %s205 = smul.u32 16, %s16
      %s206 = smul.u32 16, %s16
      %p207 = scmp.lt.s32.totalorder %s206, 31
      %s208 = scalar_select %p207, %s206, 31
      %s209 = smul.addr %s208, 4
      %s210 = scalar_lea.vmem %s2, %s209
      %s211 = smul.u32 16, %s16
      %p212 = scmp.lt.s32.totalorder %s16, 1
      %s213 = scalar_select %p212, %s16, 1
      %s214 = scalar_lea.vmem %s3, %s213
      %p215 = scmp.lt.s32.totalorder %s16, 1
      %s216 = scalar_select %p215, %s16, 1
      %s217 = scalar_lea.vmem %s4, %s216
      %v218 = vld [vmem:[%s204] sm:$0xf]
      %v219 = vld [vmem:[%s204 + $0x4] sm:$0xf]
      %v220 = vld [vmem:[%s204 + $0x8] sm:$0xf]
      %v221 = vld [vmem:[%s204 + $0xc] sm:$0xf]
      %v222 = vld [vmem:[%s204 + $0x10] sm:$0xf]
      %v223 = vld [vmem:[%s204 + $0x14] sm:$0xf]
      %v224 = vld [vmem:[%s204 + $0x18] sm:$0xf]
      %v225 = vld [vmem:[%s204 + $0x1c] sm:$0xf]
      %v226 = vld [vmem:[%s204 + $0x20] sm:$0xf]
      %v227 = vld [vmem:[%s204 + $0x24] sm:$0xf]
      %v228 = vld [vmem:[%s204 + $0x28] sm:$0xf]
      %v229 = vld [vmem:[%s204 + $0x2c] sm:$0xf]
      %v230 = vld [vmem:[%s204 + $0x30] sm:$0xf]
      %v231 = vld [vmem:[%s204 + $0x34] sm:$0xf]
      %v232 = vld [vmem:[%s204 + $0x38] sm:$0xf]
      %v233 = vld [vmem:[%s204 + $0x3c] sm:$0xf]
      %v234 = vld [vmem:[%s1] sm:$0xf]
      %v235 = vld [vmem:[%s1 + $0x4] sm:$0xf]
      %v236 = vld [vmem:[%s1 + $0x8] sm:$0xf]
      %v237 = vld [vmem:[%s1 + $0xc] sm:$0xf]
      %v238 = vld [vmem:[%s1 + $0x10] sm:$0xf]
      %v239 = vld [vmem:[%s1 + $0x14] sm:$0xf]
      %v240 = vld [vmem:[%s1 + $0x18] sm:$0xf]
      %v241 = vld [vmem:[%s1 + $0x1c] sm:$0xf]
      %v242 = vld [vmem:[%s1 + $0x20] sm:$0xf]
      %v243 = vld [vmem:[%s1 + $0x24] sm:$0xf]
      %v244 = vld [vmem:[%s1 + $0x28] sm:$0xf]
      %v245 = vld [vmem:[%s1 + $0x2c] sm:$0xf]
      %v246 = vld [vmem:[%s1 + $0x30] sm:$0xf]
      %v247 = vld [vmem:[%s1 + $0x34] sm:$0xf]
      %v248 = vld [vmem:[%s1 + $0x38] sm:$0xf]
      %v249 = vld [vmem:[%s1 + $0x3c] sm:$0xf]
      %v266 = vunpack.c.l.b16 %v218
      %v267 = vunpack.c.l.b16 %v219
      %v268 = vunpack.c.l.b16 %v220
      %v269 = vunpack.c.l.b16 %v221
      %v270 = vunpack.c.l.b16 %v222
      %v271 = vunpack.c.l.b16 %v223
      %v272 = vunpack.c.l.b16 %v224
      %v273 = vunpack.c.l.b16 %v225
      %v274 = vunpack.c.l.b16 %v226
      %v275 = vunpack.c.l.b16 %v227
      %v276 = vunpack.c.l.b16 %v228
      %v277 = vunpack.c.l.b16 %v229
      %v278 = vunpack.c.l.b16 %v230
      %v279 = vunpack.c.l.b16 %v231
      %v280 = vunpack.c.l.b16 %v232
      %v281 = vunpack.c.l.b16 %v233
      %v282 = vpack.c.b16 %v267, %v266
      %v283 = vpack.c.b16 %v269, %v268
      %v284 = vpack.c.b16 %v271, %v270
      %v285 = vpack.c.b16 %v273, %v272
      %v286 = vpack.c.b16 %v275, %v274
      %v287 = vpack.c.b16 %v277, %v276
      %v288 = vpack.c.b16 %v279, %v278
      %v289 = vpack.c.b16 %v281, %v280
      %v314 = vunpack.c.l.b16 %v234
      %v315 = vunpack.c.l.b16 %v235
      %v316 = vunpack.c.l.b16 %v236
      %v317 = vunpack.c.l.b16 %v237
      %v318 = vunpack.c.l.b16 %v238
      %v319 = vunpack.c.l.b16 %v239
      %v320 = vunpack.c.l.b16 %v240
      %v321 = vunpack.c.l.b16 %v241
      %v322 = vunpack.c.l.b16 %v242
      %v323 = vunpack.c.l.b16 %v243
      %v324 = vunpack.c.l.b16 %v244
      %v325 = vunpack.c.l.b16 %v245
      %v326 = vunpack.c.l.b16 %v246
      %v327 = vunpack.c.l.b16 %v247
      %v328 = vunpack.c.l.b16 %v248
      %v329 = vunpack.c.l.b16 %v249
      %v330 = vpack.c.b16 %v315, %v314
      %v331 = vpack.c.b16 %v317, %v316
      %v332 = vpack.c.b16 %v319, %v318
      %v333 = vpack.c.b16 %v321, %v320
      %v334 = vpack.c.b16 %v323, %v322
      %v335 = vpack.c.b16 %v325, %v324
      %v336 = vpack.c.b16 %v327, %v326
      %v337 = vpack.c.b16 %v329, %v328
      %346 = vmatpush.bf16.msra.mxu0 %v337
      %347 = vmatpush.bf16.msra.mxu0 %v336
      %348 = vmatpush.bf16.msra.mxu0 %v335
      %349 = vmatpush.bf16.msra.mxu0 %v334
      %350 = vmatpush.bf16.msra.mxu0 %v333
      %351 = vmatpush.bf16.msra.mxu0 %v332
      %352 = vmatpush.bf16.msra.mxu0 %v331
      %353 = vmatpush.bf16.msra.mxu0 %v330
      %354 = vmatmul.bf16.gmra.mxu0 %v282
      %v355 = vpop.f32.mrf.mxu0
      %v356 = vadd.f32 0.0, %v355
      %v357 = vpop.f32.mrf.mxu0
      %v358 = vadd.f32 0.0, %v357
      %359 = vmatmul.bf16.gmra.mxu0 %v283
      %v360 = vpop.f32.mrf.mxu0
      %v361 = vadd.f32 0.0, %v360
      %v362 = vpop.f32.mrf.mxu0
      %v363 = vadd.f32 0.0, %v362
      %364 = vmatmul.bf16.gmra.mxu0 %v284
      %v365 = vpop.f32.mrf.mxu0
      %v366 = vadd.f32 0.0, %v365
      %v367 = vpop.f32.mrf.mxu0
      %v368 = vadd.f32 0.0, %v367
      %369 = vmatmul.bf16.gmra.mxu0 %v285
      %v370 = vpop.f32.mrf.mxu0
      %v371 = vadd.f32 0.0, %v370
      %v372 = vpop.f32.mrf.mxu0
      %v373 = vadd.f32 0.0, %v372
      %374 = vmatmul.bf16.gmra.mxu0 %v286
      %v375 = vpop.f32.mrf.mxu0
      %v376 = vadd.f32 0.0, %v375
      %v377 = vpop.f32.mrf.mxu0
      %v378 = vadd.f32 0.0, %v377
      %379 = vmatmul.bf16.gmra.mxu0 %v287
      %v380 = vpop.f32.mrf.mxu0
      %v381 = vadd.f32 0.0, %v380
      %v382 = vpop.f32.mrf.mxu0
      %v383 = vadd.f32 0.0, %v382
      %384 = vmatmul.bf16.gmra.mxu0 %v288
      %v385 = vpop.f32.mrf.mxu0
      %v386 = vadd.f32 0.0, %v385
      %v387 = vpop.f32.mrf.mxu0
      %v388 = vadd.f32 0.0, %v387
      %389 = vmatmul.bf16.gmra.mxu0 %v289
      %v390 = vpop.f32.mrf.mxu0
      %v391 = vadd.f32 0.0, %v390
      %v392 = vpop.f32.mrf.mxu0
      %v393 = vadd.f32 0.0, %v392
      %394 = vdwg.mxu0
      %v395 = vpack.c.bf16 %v356, %v356
      %v396 = vpack.c.bf16 %v358, %v358
      %v397 = vpack.c.bf16 %v361, %v361
      %v398 = vpack.c.bf16 %v363, %v363
      %v399 = vpack.c.bf16 %v366, %v366
      %v400 = vpack.c.bf16 %v368, %v368
      %v401 = vpack.c.bf16 %v371, %v371
      %v402 = vpack.c.bf16 %v373, %v373
      %v403 = vpack.c.bf16 %v376, %v376
      %v404 = vpack.c.bf16 %v378, %v378
      %v405 = vpack.c.bf16 %v381, %v381
      %v406 = vpack.c.bf16 %v383, %v383
      %v407 = vpack.c.bf16 %v386, %v386
      %v408 = vpack.c.bf16 %v388, %v388
      %v409 = vpack.c.bf16 %v391, %v391
      %v410 = vpack.c.bf16 %v393, %v393
      %411 = vst [vmem:[%s210] sm:$0xf] %v395
      %412 = vst [vmem:[%s210 + $0x4] sm:$0xf] %v396
      %413 = vst [vmem:[%s210 + $0x8] sm:$0xf] %v397
      %414 = vst [vmem:[%s210 + $0xc] sm:$0xf] %v398
      %415 = vst [vmem:[%s210 + $0x10] sm:$0xf] %v399
      %416 = vst [vmem:[%s210 + $0x14] sm:$0xf] %v400
      %417 = vst [vmem:[%s210 + $0x18] sm:$0xf] %v401
      %418 = vst [vmem:[%s210 + $0x1c] sm:$0xf] %v402
      %419 = vst [vmem:[%s210 + $0x20] sm:$0xf] %v403
      %420 = vst [vmem:[%s210 + $0x24] sm:$0xf] %v404
      %421 = vst [vmem:[%s210 + $0x28] sm:$0xf] %v405
      %422 = vst [vmem:[%s210 + $0x2c] sm:$0xf] %v406
      %423 = vst [vmem:[%s210 + $0x30] sm:$0xf] %v407
      %424 = vst [vmem:[%s210 + $0x34] sm:$0xf] %v408
      %425 = vst [vmem:[%s210 + $0x38] sm:$0xf] %v409
      %426 = vst [vmem:[%s210 + $0x3c] sm:$0xf] %v410
      %v427 = vunpack.c.l.bf16 %v395
      %v428 = vunpack.c.l.bf16 %v396
      %v429 = vunpack.c.l.bf16 %v397
      %v430 = vunpack.c.l.bf16 %v398
      %v431 = vunpack.c.l.bf16 %v399
      %v432 = vunpack.c.l.bf16 %v400
      %v433 = vunpack.c.l.bf16 %v401
      %v434 = vunpack.c.l.bf16 %v402
      %v435 = vunpack.c.l.bf16 %v403
      %v436 = vunpack.c.l.bf16 %v404
      %v437 = vunpack.c.l.bf16 %v405
      %v438 = vunpack.c.l.bf16 %v406
      %v439 = vunpack.c.l.bf16 %v407
      %v440 = vunpack.c.l.bf16 %v408
      %v441 = vunpack.c.l.bf16 %v409
      %v442 = vunpack.c.l.bf16 %v410
      %v443 = vadd.f32 %v427, %v428
      %v444 = vadd.f32 %v443, %v429
      %v445 = vadd.f32 %v444, %v430
      %v446 = vadd.f32 %v445, %v431
      %v447 = vadd.f32 %v446, %v432
      %v448 = vadd.f32 %v447, %v433
      %v449 = vadd.f32 %v448, %v434
      %v450 = vadd.f32 %v449, %v435
      %v451 = vadd.f32 %v450, %v436
      %v452 = vadd.f32 %v451, %v437
      %v453 = vadd.f32 %v452, %v438
      %v454 = vadd.f32 %v453, %v439
      %v455 = vadd.f32 %v454, %v440
      %v456 = vadd.f32 %v455, %v441
      %v457 = vadd.f32 %v456, %v442
      %v458 = vrot.slane %v457, 4
      %v459 = vadd.f32 %v457, %v458
      %v460 = vrot.slane %v459, 2
      %v461 = vadd.f32 %v459, %v460
      %v462 = vrot.slane %v461, 1
      %v463 = vadd.f32 %v461, %v462
      %464 = vst [vmem:[%s214] sm:$0x1] %v463
      %v465 = vmul.f32 %v427, %v427
      %v466 = vmul.f32 %v428, %v428
      %v467 = vmul.f32 %v429, %v429
      %v468 = vmul.f32 %v430, %v430
      %v469 = vmul.f32 %v431, %v431
      %v470 = vmul.f32 %v432, %v432
      %v471 = vmul.f32 %v433, %v433
      %v472 = vmul.f32 %v434, %v434
      %v473 = vmul.f32 %v435, %v435
      %v474 = vmul.f32 %v436, %v436
      %v475 = vmul.f32 %v437, %v437
      %v476 = vmul.f32 %v438, %v438
      %v477 = vmul.f32 %v439, %v439
      %v478 = vmul.f32 %v440, %v440
      %v479 = vmul.f32 %v441, %v441
      %v480 = vmul.f32 %v442, %v442
      %v481 = vadd.f32 %v465, %v466
      %v482 = vadd.f32 %v481, %v467
      %v483 = vadd.f32 %v482, %v468
      %v484 = vadd.f32 %v483, %v469
      %v485 = vadd.f32 %v484, %v470
      %v486 = vadd.f32 %v485, %v471
      %v487 = vadd.f32 %v486, %v472
      %v488 = vadd.f32 %v487, %v473
      %v489 = vadd.f32 %v488, %v474
      %v490 = vadd.f32 %v489, %v475
      %v491 = vadd.f32 %v490, %v476
      %v492 = vadd.f32 %v491, %v477
      %v493 = vadd.f32 %v492, %v478
      %v494 = vadd.f32 %v493, %v479
      %v495 = vadd.f32 %v494, %v480
      %v496 = vrot.slane %v495, 4
      %v497 = vadd.f32 %v495, %v496
      %v498 = vrot.slane %v497, 2
      %v499 = vadd.f32 %v497, %v498
      %v500 = vrot.slane %v499, 1
      %v501 = vadd.f32 %v499, %v500
      %502 = vst [vmem:[%s217] sm:$0x1] %v501
      %s503 = smul.u32 16, %s16
      %p504 = scmp.lt.s32.totalorder %s503, 31
      %s505 = scalar_select %p504, %s503, 31
      %s506 = smul.addr %s505, 4
      %s507 = scalar_lea.vmem %s2, %s506
      %p508 = scmp.lt.s32.totalorder %s16, 1
      %s509 = scalar_select %p508, %s16, 1
      %s510 = scalar_lea.vmem %s3, %s509
      %p511 = scmp.lt.s32.totalorder %s16, 1
      %s512 = scalar_select %p511, %s16, 1
      %s513 = scalar_lea.vmem %s4, %s512
      // Predicated region
      $region29: #{down_forward.2} parent=27 // pred_check
        %p514 = pneg %p81
      $region30: #{down_forward.2} parent=27 // pred_check_branch
        %516 = sbr.rel (%p514) target = $region32
      $region31: #{down_forward.2} parent=27 // pred_region
        %s517 = smul.u32 16, %s16
      $region32: #{down_forward.2} parent=27 // pred_fallthru
        _
      // Predicated region
      $region33: #{down_forward.2} parent=27 // pred_check
        %p518 = pneg %p107
      $region34: #{down_forward.2} parent=27 // pred_check_branch
        %520 = sbr.rel (%p518) target = $region36
      $region35: #{down_forward.2} parent=27 // pred_region
        _
      $region36: #{down_forward.2} parent=27 // pred_fallthru
        _
      // Predicated region
      $region37: #{down_forward.2} parent=27 // pred_check
        %p521 = pneg %p133
      $region38: #{down_forward.2} parent=27 // pred_check_branch
        %523 = sbr.rel (%p521) target = $region40
      $region39: #{down_forward.2} parent=27 // pred_region
        _
      $region40: #{down_forward.2} parent=27 // pred_fallthru
        _
    $region28: #{down_forward.2} parent=5 // pred_fallthru
      _
    %p524 = scmp.le.s32.totalorder 2, %s11
    // Predicated region
    $region41: #{down_forward.2} parent=5 // pred_check
      %p525 = pneg %p524
    $region42: #{down_forward.2} parent=5 // pred_check_branch
      %527 = sbr.rel (%p525) target = $region44
    $region43: #{down_forward.2} parent=5 // pred_region
      %s528 = ssub.s32 %s11, 2
      // Predicated region
      $region45: #{down_forward.2} parent=43 // pred_check
        %p529 = pneg %p87
      $region46: #{down_forward.2} parent=43 // pred_check_branch
        %531 = sbr.rel (%p529) target = $region48
      $region47: #{down_forward.2} parent=43 // pred_region
        %s532 = smul.u32 16, %s17
        %p533 = scmp.lt.s32.totalorder %s532, 31
        %s534 = scalar_select %p533, %s532, 31
        %s535 = smul.addr %s534, 4
        %s536 = scalar_lea.vmem %s2, %s535
      $region48: #{down_forward.2} parent=43 // pred_fallthru
        _
      // Predicated region
      $region49: #{down_forward.2} parent=43 // pred_check
        %p537 = pneg %p113
      $region50: #{down_forward.2} parent=43 // pred_check_branch
        %539 = sbr.rel (%p537) target = $region52
      $region51: #{down_forward.2} parent=43 // pred_region
        %p540 = scmp.lt.s32.totalorder %s17, 1
        %s541 = scalar_select %p540, %s17, 1
        %s542 = scalar_lea.vmem %s3, %s541
      $region52: #{down_forward.2} parent=43 // pred_fallthru
        _
      // Predicated region
      $region53: #{down_forward.2} parent=43 // pred_check
        %p543 = pneg %p139
      $region54: #{down_forward.2} parent=43 // pred_check_branch
        %545 = sbr.rel (%p543) target = $region56
      $region55: #{down_forward.2} parent=43 // pred_region
        %p546 = scmp.lt.s32.totalorder %s17, 1
        %s547 = scalar_select %p546, %s17, 1
        %s548 = scalar_lea.vmem %s4, %s547
      $region56: #{down_forward.2} parent=43 // pred_fallthru
        _
    $region44: #{down_forward.2} parent=5 // pred_fallthru
      _
  $region6: #{down_forward.2} parent=0 // loop_footer
    %s15 = sadd.s32 1, %s11
  $region7: #{down_forward.2} parent=0 // loop_footer_branch
    %10 = sbr.rel target = $region3
  $region8: #{down_forward.2} parent=0 // loop_exit
    _

</llo_original>
